<compile_context>
chip_gen: v5e
topology: v5e:2x2
jax: 0.10.0
libtpu: 0.0.40
codegen_flags: <defaults>
</compile_context>

<pallas_src>
import functools

import jax
import jax.numpy as jnp
from jax.experimental import pallas as pl
from jax.experimental.pallas import tpu as pltpu

_N_SLAB = 256  # lane width of each output slab in the second matmul


def _round_up(x, m):
    return ((x + m - 1) // m) * m


def _vmem_capacity_bytes():
    try:
        cap = getattr(pltpu.get_tpu_info(), "vmem_capacity_bytes", None)
        if cap:
            return int(cap)
    except Exception:
        pass
    return 64 << 20  # conservative fallback (v7x-sized)


def teacnet_kernel(x_ref, w1_ref, b1_ref, w2_ref, b2_ref, ft_ref, logit_ref):
    # First linear (fit_dim_Net): MXU matmul, f32 accumulation.
    x = x_ref[...].astype(w1_ref.dtype)
    ft_f32 = jnp.dot(x, w1_ref[...], preferred_element_type=jnp.float32)
    ft_f32 = ft_f32 + b1_ref[...]
    ft_ref[...] = ft_f32.astype(ft_ref.dtype)

    # Second linear (cl_Net), fused: ft never round-trips to HBM. Split the
    # N dim into slabs so the f32 intermediate stays bounded and the store of
    # slab k overlaps the matmul of slab k+1.
    ft_c = ft_f32.astype(w2_ref.dtype)
    n_out = logit_ref.shape[1]
    for n0 in range(0, n_out, _N_SLAB):
        n1 = min(n0 + _N_SLAB, n_out)
        lg = jnp.dot(ft_c, w2_ref[:, n0:n1], preferred_element_type=jnp.float32)
        lg = lg + b2_ref[:, n0:n1]
        logit_ref[:, n0:n1] = lg.astype(logit_ref.dtype)


def prepare_teacnet_params(w1, b1, w2, b2, compute_dtype=None):
    """One-time parameter prep (hoisted out of the per-call hot path).

    Weights are (in, out) == PyTorch W.T, optionally cast to a lower-precision
    MXU compute dtype (bf16). Biases are kept in f32 as (1, N)."""
    cd = jnp.dtype(compute_dtype) if compute_dtype is not None else jnp.dtype(w1.dtype)
    return (w1.astype(cd),
            jnp.asarray(b1, jnp.float32).reshape(1, -1),
            w2.astype(cd),
            jnp.asarray(b2, jnp.float32).reshape(1, -1))


@functools.partial(jax.jit, static_argnames=("out_dtype",))
def teacnet_forward(x, w1, b1, w2, b2, out_dtype=None):
    batch, f_dim = x.shape
    f_dim_w, feature_dim = w1.shape
    assert f_dim_w == f_dim
    n_classes = w2.shape[1]
    out_dtype = jnp.dtype(out_dtype) if out_dtype is not None else jnp.dtype(x.dtype)

    c_item = jnp.dtype(w1.dtype).itemsize   # MXU compute dtype (weights)
    x_item = jnp.dtype(x.dtype).itemsize
    o_item = out_dtype.itemsize
    sublane = 8 if min(c_item, x_item, o_item) >= 4 else 16

    # Internal (hardware-padded) sizes, used only for the VMEM estimate.
    lane = lambda n: _round_up(n, 128)
    f_dim_p, feat_p, ncls_p = lane(f_dim), lane(feature_dim), lane(n_classes)
    slab_p = lane(min(_N_SLAB, n_classes))

    # Resident weights/biases: single-buffered (pl.Buffered(1)).
    weight_bytes = (_round_up(f_dim, sublane) * feat_p * c_item
                    + _round_up(feature_dim, sublane) * ncls_p * c_item
                    + 8 * feat_p * 4 + 8 * ncls_p * 4)

    def dyn_bytes(t):
        # Double-buffered x / ft / logit tiles + in-kernel f32 intermediates.
        tiles = 2 * t * (f_dim_p * x_item + feat_p * o_item + ncls_p * o_item)
        interm = t * (feat_p * (4 + c_item) + slab_p * (4 + o_item))
        return tiles + interm

    # Generation-aware budget / starting tile.
    vmem_cap = _vmem_capacity_bytes()
    if vmem_cap >= (100 << 20):          # v5e / v6e: 128 MiB physical VMEM
        budget = 56 << 20
        tb = 2048 if c_item <= 2 else 1024
    else:                                # v7x: 64 MiB physical / 32 MiB scoped
        budget = 26 << 20
        tb = 512 if c_item <= 2 else 256

    tb = min(tb, _round_up(batch, sublane))
    if batch >= 2 * sublane:             # >=2 grid steps so both v7x TCs work
        tb = min(tb, _round_up(pl.cdiv(batch, 2), sublane))
    tb = max(sublane, (tb // sublane) * sublane)
    while tb > sublane and weight_bytes + dyn_bytes(tb) > budget:
        tb = max(sublane, ((tb // 2) // sublane) * sublane)

    grid = (pl.cdiv(batch, tb),)

    vmem_need = weight_bytes + dyn_bytes(tb)
    vmem_limit = int(min(vmem_cap - (4 << 20),
                         max(32 << 20, 1.3 * vmem_need + (4 << 20))))

    cost = pl.CostEstimate(
        flops=2 * batch * (f_dim * feature_dim + feature_dim * n_classes),
        transcendentals=0,
        bytes_accessed=(x.size * x_item
                        + w1.size * c_item + w2.size * c_item
                        + b1.size * 4 + b2.size * 4
                        + batch * feature_dim * o_item
                        + batch * n_classes * o_item),
    )

    resident = dict(pipeline_mode=pl.Buffered(1))
    return pl.pallas_call(
        teacnet_kernel,
        out_shape=(
            jax.ShapeDtypeStruct((batch, feature_dim), out_dtype),
            jax.ShapeDtypeStruct((batch, n_classes), out_dtype),
        ),
        grid=grid,
        in_specs=[
            pl.BlockSpec((tb, f_dim), lambda i: (i, 0)),                           # x tile
            pl.BlockSpec((f_dim, feature_dim), lambda i: (0, 0), **resident),      # w1
            pl.BlockSpec((1, feature_dim), lambda i: (0, 0), **resident),          # b1
            pl.BlockSpec((feature_dim, n_classes), lambda i: (0, 0), **resident),  # w2
            pl.BlockSpec((1, n_classes), lambda i: (0, 0), **resident),            # b2
        ],
        out_specs=(
            pl.BlockSpec((tb, feature_dim), lambda i: (i, 0)),
            pl.BlockSpec((tb, n_classes), lambda i: (i, 0)),
        ),
        compiler_params=pltpu.CompilerParams(
            dimension_semantics=("parallel",),
            vmem_limit_bytes=vmem_limit,
        ),
        cost_estimate=cost,
    )(x, w1, b1, w2, b2)


def init_teacnet_params(key, f_dim, feature_dim, n_classes=1000,
                        dtype=jnp.float32):
    # Deterministic PyTorch-style init: U(-1/sqrt(fan_in), 1/sqrt(fan_in)).
    k1, k2, k3, k4 = jax.random.split(key, 4)
    bound1 = 1.0 / (f_dim ** 0.5)
    bound2 = 1.0 / (feature_dim ** 0.5)
    # Stored as (in, out) — equivalent to PyTorch's (out, in) transposed.
    w1 = jax.random.uniform(k1, (f_dim, feature_dim), dtype, -bound1, bound1)
    b1 = jax.random.uniform(k2, (1, feature_dim), dtype, -bound1, bound1)
    w2 = jax.random.uniform(k3, (feature_dim, n_classes), dtype, -bound2, bound2)
    b2 = jax.random.uniform(k4, (1, n_classes), dtype, -bound2, bound2)
    return w1, b1, w2, b2


if __name__ == "__main__":
    key = jax.random.PRNGKey(0)
    kx, kp = jax.random.split(key)

    batch, f_dim, feature_dim = 8, 32, 64
    x = jax.random.normal(kx, (batch, f_dim), jnp.float32)
    w1, b1, w2, b2 = init_teacnet_params(kp, f_dim, feature_dim)

    # Plain-JAX reference (identical semantics to TeacNet.forward).
    ft_ref = x @ w1 + b1
    logit_ref = ft_ref @ w2 + b2

    # f32 compute path: tight check.
    p32 = prepare_teacnet_params(w1, b1, w2, b2)
    ft, logit = teacnet_forward(x, *p32)
    jax.block_until_ready((ft, logit))
    assert ft.shape == (batch, feature_dim) and logit.shape == (batch, 1000)
    assert jnp.allclose(ft, ft_ref, atol=1e-5, rtol=1e-5)
    assert jnp.allclose(logit, logit_ref, atol=1e-4, rtol=1e-4)

    # bf16 MXU compute (recommended on v6e/v7x): loose check.
    pbf = prepare_teacnet_params(w1, b1, w2, b2, compute_dtype=jnp.bfloat16)
    ft_bf, logit_bf = teacnet_forward(x, *pbf)
    jax.block_until_ready((ft_bf, logit_bf))
    assert jnp.allclose(ft_bf, ft_ref, atol=1e-1, rtol=1e-1)
    assert jnp.allclose(logit_bf, logit_ref, atol=1e-1, rtol=1e-1)

    # bf16 outputs (halves the dominant logit writeback traffic): loose check.
    ft_bo, logit_bo = teacnet_forward(x, *pbf, out_dtype=jnp.bfloat16)
    jax.block_until_ready((ft_bo, logit_bo))
    assert ft_bo.dtype == jnp.bfloat16 and logit_bo.dtype == jnp.bfloat16
    assert jnp.allclose(ft_bo.astype(jnp.float32), ft_ref, atol=1e-1, rtol=1e-1)
    assert jnp.allclose(logit_bo.astype(jnp.float32), logit_ref, atol=1e-1, rtol=1e-1)

    print("KERNEL_OK")
</pallas_src>

<mosaic_0001>
module attributes {stable_mosaic.version = 11 : i64} {
  func.func @teacnet_kernel(%arg0: i32, %arg1: memref<8x32xf32, #tpu.memory_space<vmem>>, %arg2: memref<32x64xf32, #tpu.memory_space<vmem>>, %arg3: memref<1x64xf32, #tpu.memory_space<vmem>>, %arg4: memref<64x1000xf32, #tpu.memory_space<vmem>>, %arg5: memref<1x1000xf32, #tpu.memory_space<vmem>>, %arg6: memref<8x64xf32, #tpu.memory_space<vmem>>, %arg7: memref<8x1000xf32, #tpu.memory_space<vmem>>) attributes {dimension_semantics = [#tpu.dimension_semantics<parallel>], iteration_bounds = array<i64: 1>, scalar_prefetch = 0 : i64, scratch_operands = 0 : i64, tpu.core_type = #tpu.core_type<tc>, window_params = [{transform_indices = @transform_0, window_bounds = array<i64: 8, 32>}, {pipeline_mode = #tpu.pipeline_mode<synchronous>, transform_indices = @transform_1, window_bounds = array<i64: 32, 64>}, {pipeline_mode = #tpu.pipeline_mode<synchronous>, transform_indices = @transform_2, window_bounds = array<i64: 1, 64>}, {pipeline_mode = #tpu.pipeline_mode<synchronous>, transform_indices = @transform_3, window_bounds = array<i64: 64, 1000>}, {pipeline_mode = #tpu.pipeline_mode<synchronous>, transform_indices = @transform_4, window_bounds = array<i64: 1, 1000>}, {transform_indices = @transform_5, window_bounds = array<i64: 8, 64>}, {transform_indices = @transform_6, window_bounds = array<i64: 8, 1000>}]} {
    %c0 = arith.constant 0 : index
    %c0_0 = arith.constant 0 : index
    %0 = vector.load %arg1[%c0, %c0_0] : memref<8x32xf32, #tpu.memory_space<vmem>>, vector<8x32xf32>
    %c0_1 = arith.constant 0 : index
    %c0_2 = arith.constant 0 : index
    %1 = vector.load %arg2[%c0_1, %c0_2] : memref<32x64xf32, #tpu.memory_space<vmem>>, vector<32x64xf32>
    %cst = arith.constant dense<0.000000e+00> : vector<8x64xf32>
    %2 = tpu.matmul %0, %1, %cst {dimension_numbers = #tpu.dot_dimension_numbers<[1], [0], [0], [1], [0, 0, 1, 1], [], []>} : vector<8x32xf32>, vector<32x64xf32>, vector<8x64xf32> -> vector<8x64xf32>
    %c0_3 = arith.constant 0 : index
    %c0_4 = arith.constant 0 : index
    %3 = vector.load %arg3[%c0_3, %c0_4] : memref<1x64xf32, #tpu.memory_space<vmem>>, vector<1x64xf32>
    %4 = vector.broadcast %3 : vector<1x64xf32> to vector<8x64xf32>
    %5 = arith.addf %2, %4 : vector<8x64xf32>
    %c0_5 = arith.constant 0 : index
    %c0_6 = arith.constant 0 : index
    %6 = vector.load %arg6[%c0_5, %c0_6] : memref<8x64xf32, #tpu.memory_space<vmem>>, vector<8x64xf32>
    tpu.vector_store %arg6[%c0_5, %c0_6], %5 {strides = array<i32>} : memref<8x64xf32, #tpu.memory_space<vmem>>, vector<8x64xf32>,
    %c0_7 = arith.constant 0 : index
    %c0_8 = arith.constant 0 : index
    %7 = vector.load %arg4[%c0_7, %c0_8] : memref<64x1000xf32, #tpu.memory_space<vmem>>, vector<64x256xf32>
    %cst_9 = arith.constant dense<0.000000e+00> : vector<8x256xf32>
    %8 = tpu.matmul %5, %7, %cst_9 {dimension_numbers = #tpu.dot_dimension_numbers<[1], [0], [0], [1], [0, 0, 1, 1], [], []>} : vector<8x64xf32>, vector<64x256xf32>, vector<8x256xf32> -> vector<8x256xf32>
    %c0_10 = arith.constant 0 : index
    %c0_11 = arith.constant 0 : index
    %9 = vector.load %arg5[%c0_10, %c0_11] : memref<1x1000xf32, #tpu.memory_space<vmem>>, vector<1x256xf32>
    %10 = vector.broadcast %9 : vector<1x256xf32> to vector<8x256xf32>
    %11 = arith.addf %8, %10 : vector<8x256xf32>
    %c0_12 = arith.constant 0 : index
    %c0_13 = arith.constant 0 : index
    %12 = vector.load %arg7[%c0_12, %c0_13] : memref<8x1000xf32, #tpu.memory_space<vmem>>, vector<8x256xf32>
    tpu.vector_store %arg7[%c0_12, %c0_13], %11 {strides = array<i32>} : memref<8x1000xf32, #tpu.memory_space<vmem>>, vector<8x256xf32>,
    %c0_14 = arith.constant 0 : index
    %c256 = arith.constant 256 : index
    %13 = vector.load %arg4[%c0_14, %c256] : memref<64x1000xf32, #tpu.memory_space<vmem>>, vector<64x256xf32>
    %cst_15 = arith.constant dense<0.000000e+00> : vector<8x256xf32>
    %14 = tpu.matmul %5, %13, %cst_15 {dimension_numbers = #tpu.dot_dimension_numbers<[1], [0], [0], [1], [0, 0, 1, 1], [], []>} : vector<8x64xf32>, vector<64x256xf32>, vector<8x256xf32> -> vector<8x256xf32>
    %c0_16 = arith.constant 0 : index
    %c256_17 = arith.constant 256 : index
    %15 = vector.load %arg5[%c0_16, %c256_17] : memref<1x1000xf32, #tpu.memory_space<vmem>>, vector<1x256xf32>
    %16 = vector.broadcast %15 : vector<1x256xf32> to vector<8x256xf32>
    %17 = arith.addf %14, %16 : vector<8x256xf32>
    %c0_18 = arith.constant 0 : index
    %c256_19 = arith.constant 256 : index
    %18 = vector.load %arg7[%c0_18, %c256_19] : memref<8x1000xf32, #tpu.memory_space<vmem>>, vector<8x256xf32>
    tpu.vector_store %arg7[%c0_18, %c256_19], %17 {strides = array<i32>} : memref<8x1000xf32, #tpu.memory_space<vmem>>, vector<8x256xf32>,
    %c0_20 = arith.constant 0 : index
    %c512 = arith.constant 512 : index
    %19 = vector.load %arg4[%c0_20, %c512] : memref<64x1000xf32, #tpu.memory_space<vmem>>, vector<64x256xf32>
    %cst_21 = arith.constant dense<0.000000e+00> : vector<8x256xf32>
    %20 = tpu.matmul %5, %19, %cst_21 {dimension_numbers = #tpu.dot_dimension_numbers<[1], [0], [0], [1], [0, 0, 1, 1], [], []>} : vector<8x64xf32>, vector<64x256xf32>, vector<8x256xf32> -> vector<8x256xf32>
    %c0_22 = arith.constant 0 : index
    %c512_23 = arith.constant 512 : index
    %21 = vector.load %arg5[%c0_22, %c512_23] : memref<1x1000xf32, #tpu.memory_space<vmem>>, vector<1x256xf32>
    %22 = vector.broadcast %21 : vector<1x256xf32> to vector<8x256xf32>
    %23 = arith.addf %20, %22 : vector<8x256xf32>
    %c0_24 = arith.constant 0 : index
    %c512_25 = arith.constant 512 : index
    %24 = vector.load %arg7[%c0_24, %c512_25] : memref<8x1000xf32, #tpu.memory_space<vmem>>, vector<8x256xf32>
    tpu.vector_store %arg7[%c0_24, %c512_25], %23 {strides = array<i32>} : memref<8x1000xf32, #tpu.memory_space<vmem>>, vector<8x256xf32>,
    %c0_26 = arith.constant 0 : index
    %c768 = arith.constant 768 : index
    %25 = vector.load %arg4[%c0_26, %c768] : memref<64x1000xf32, #tpu.memory_space<vmem>>, vector<64x232xf32>
    %cst_27 = arith.constant dense<0.000000e+00> : vector<8x232xf32>
    %26 = tpu.matmul %5, %25, %cst_27 {dimension_numbers = #tpu.dot_dimension_numbers<[1], [0], [0], [1], [0, 0, 1, 1], [], []>} : vector<8x64xf32>, vector<64x232xf32>, vector<8x232xf32> -> vector<8x232xf32>
    %c0_28 = arith.constant 0 : index
    %c768_29 = arith.constant 768 : index
    %27 = vector.load %arg5[%c0_28, %c768_29] : memref<1x1000xf32, #tpu.memory_space<vmem>>, vector<1x232xf32>
    %28 = vector.broadcast %27 : vector<1x232xf32> to vector<8x232xf32>
    %29 = arith.addf %26, %28 : vector<8x232xf32>
    %c0_30 = arith.constant 0 : index
    %c768_31 = arith.constant 768 : index
    %30 = vector.load %arg7[%c0_30, %c768_31] : memref<8x1000xf32, #tpu.memory_space<vmem>>, vector<8x232xf32>
    tpu.vector_store %arg7[%c0_30, %c768_31], %29 {strides = array<i32>} : memref<8x1000xf32, #tpu.memory_space<vmem>>, vector<8x232xf32>,
    return
  }
  func.func @transform_0(%arg0: i32) -> (i32, i32) {
    %c0_i32 = arith.constant 0 : i32
    %c0_i32_0 = arith.constant 0 : i32
    return %arg0, %c0_i32 : i32, i32
  }
  func.func @transform_1(%arg0: i32) -> (i32, i32) {
    %c0_i32 = arith.constant 0 : i32
    %c0_i32_0 = arith.constant 0 : i32
    %c0_i32_1 = arith.constant 0 : i32
    return %c0_i32, %c0_i32_0 : i32, i32
  }
  func.func @transform_2(%arg0: i32) -> (i32, i32) {
    %c0_i32 = arith.constant 0 : i32
    %c0_i32_0 = arith.constant 0 : i32
    %c0_i32_1 = arith.constant 0 : i32
    return %c0_i32, %c0_i32_0 : i32, i32
  }
  func.func @transform_3(%arg0: i32) -> (i32, i32) {
    %c0_i32 = arith.constant 0 : i32
    %c0_i32_0 = arith.constant 0 : i32
    %c0_i32_1 = arith.constant 0 : i32
    return %c0_i32, %c0_i32_0 : i32, i32
  }
  func.func @transform_4(%arg0: i32) -> (i32, i32) {
    %c0_i32 = arith.constant 0 : i32
    %c0_i32_0 = arith.constant 0 : i32
    %c0_i32_1 = arith.constant 0 : i32
    return %c0_i32, %c0_i32_0 : i32, i32
  }
  func.func @transform_5(%arg0: i32) -> (i32, i32) {
    %c0_i32 = arith.constant 0 : i32
    %c0_i32_0 = arith.constant 0 : i32
    return %arg0, %c0_i32 : i32, i32
  }
  func.func @transform_6(%arg0: i32) -> (i32, i32) {
    %c0_i32 = arith.constant 0 : i32
    %c0_i32_0 = arith.constant 0 : i32
    return %arg0, %c0_i32 : i32, i32
  }
}

</mosaic_0001>

<llo_original>
// kernel: teacnet_forward.1
$region0: #{teacnet_forward.1}
  #allocation0 [shape = 'u32[]', space=smem, size = 0x4, offset = 0x4, fixed_abs, tag = 'smem constant byte address 0x4 - core index']
  #allocation1 [shape = 'u32[72,128]{1,0:T(1,128)}', space=vmem, size = 0x9000, scoped, tag = 'internal scratch']
  %s0 = inlined_call_operand.hbm [shape: f32[8,32], index: 0, kind: input, shape index: {}]
  %s1 = inlined_call_operand.hbm [shape: f32[32,64], index: 1, kind: input, shape index: {}]
  %s2 = inlined_call_operand.vmem [shape: f32[1,64], index: 2, kind: input, shape index: {}]
  %s3 = inlined_call_operand.hbm [shape: f32[64,1000], index: 3, kind: input, shape index: {}]
  %s4 = inlined_call_operand.hbm [shape: f32[1,1000], index: 4, kind: input, shape index: {}]
  %s5 = inlined_call_operand.hbm [shape: f32[8,64], index: 5, kind: output, shape index: {0}]
  %s6 = inlined_call_operand.hbm [shape: f32[8,1000], index: 6, kind: output, shape index: {1}]
  %7 = xla_tuple %s5, %s6
  %s8 = sld [smem:[#allocation0]]
  $region54: #{teacnet_forward.1} parent=0
    _
  %s10 = ssub.s32 1, %s8
  %s11 = scalar_select 0, %s10, %s8
  $region1: #{teacnet_forward.1} parent=0
    #allocation2 [shape = 'u8[4096]{0}', space=vmem, size = 0x1000, scoped, tag = 'input window, operand 0, single buffered']
    #allocation3 [shape = 's32[1]{0}', space=sflag, size = 0x4, scoped, tag = 'scoped memory for teacnet_forward.1']
    #allocation4 [shape = 's32[1]{0}', space=sflag, size = 0x4, scoped, tag = 'scoped memory for teacnet_forward.1']
    #allocation5 [shape = 'u8[16384]{0}', space=vmem, size = 0x4000, scoped, tag = 'input window, operand 1, single buffered']
    #allocation6 [shape = 's32[1]{0}', space=sflag, size = 0x4, scoped, tag = 'scoped memory for teacnet_forward.1']
    #allocation7 [shape = 'u8[262144]{0}', space=vmem, size = 0x40000, scoped, tag = 'input window, operand 3, single buffered']
    #allocation8 [shape = 'u8[4096]{0}', space=vmem, size = 0x1000, scoped, tag = 'input window, operand 4, single buffered']
    #allocation9 [shape = 's32[1]{0}', space=sflag, size = 0x4, scoped, tag = 'scoped memory for teacnet_forward.1']
    #allocation10 [shape = 'u8[4096]{0}', space=vmem, size = 0x1000, scoped, tag = 'output window, operand 0, single buffered']
    #allocation11 [shape = 'u8[32768]{0}', space=vmem, size = 0x8000, scoped, tag = 'output window, operand 1, single buffered']
    #allocation12 [shape = 's32[1]{0}', space=sflag, size = 0x4, scoped, tag = 'scoped memory for teacnet_forward.1']
    %12 = vsyncpa [#allocation3], 0
    %13 = vsyncpa [#allocation6], 0
    %14 = vsyncpa [#allocation9], 0
    %15 = vsyncpa [#allocation4], 0
    %16 = vsyncpa [#allocation12], 0
    // Predicated region
    $region2: #{teacnet_forward.1} parent=1 // pred_check
      _
    $region3: #{teacnet_forward.1} parent=1 // pred_check_branch
      %18 = sbr.rel (0) target = $region5
    $region4: #{teacnet_forward.1} parent=1 // pred_region
      %20 = vsyncadd [#allocation3], 0
      %s22 = sshll.u32 %s0, 4
      %s23 = int_to_ptr.hbm [resolvable:$true] %s22
      %s24 = sshll.u32 [#allocation2], 4
      %s25 = int_to_ptr.vmem [resolvable:$true] %s24
      %27 = dma.hbm_to_vmem [thread:$0]  %s23, 128, %s25, [#allocation3]
    $region5: #{teacnet_forward.1} parent=1 // pred_fallthru
      _
    // Predicated region
    $region6: #{teacnet_forward.1} parent=1 // pred_check
      _
    $region7: #{teacnet_forward.1} parent=1 // pred_check_branch
      %29 = sbr.rel (0) target = $region9
    $region8: #{teacnet_forward.1} parent=1 // pred_region
      %31 = vsyncadd [#allocation6], 0
      %s32 = sshll.u32 %s1, 4
      %s33 = int_to_ptr.hbm [resolvable:$true] %s32
      %s34 = sshll.u32 [#allocation5], 4
      %s35 = int_to_ptr.vmem [resolvable:$true] %s34
      %40 = dma.hbm_to_vmem [thread:$0]  %s33, 512, %s35, [#allocation6], 128, 128, 8
    $region9: #{teacnet_forward.1} parent=1 // pred_fallthru
      _
    // Predicated region
    $region10: #{teacnet_forward.1} parent=1 // pred_check
      _
    $region11: #{teacnet_forward.1} parent=1 // pred_check_branch
      %42 = sbr.rel (0) target = $region13
    $region12: #{teacnet_forward.1} parent=1 // pred_region
      _
    $region13: #{teacnet_forward.1} parent=1 // pred_fallthru
      _
    // Predicated region
    $region14: #{teacnet_forward.1} parent=1 // pred_check
      _
    $region15: #{teacnet_forward.1} parent=1 // pred_check_branch
      %44 = sbr.rel (0) target = $region17
    $region16: #{teacnet_forward.1} parent=1 // pred_region
      %46 = vsyncadd [#allocation6], 0
      %s47 = sshll.u32 %s3, 4
      %s48 = int_to_ptr.hbm [resolvable:$true] %s47
      %s49 = sshll.u32 [#allocation7], 4
      %s50 = int_to_ptr.vmem [resolvable:$true] %s49
      %55 = dma.hbm_to_vmem [thread:$0]  %s48, 8192, %s50, [#allocation6], 1024, 1024, 64
    $region17: #{teacnet_forward.1} parent=1 // pred_fallthru
      _
    // Predicated region
    $region18: #{teacnet_forward.1} parent=1 // pred_check
      _
    $region19: #{teacnet_forward.1} parent=1 // pred_check_branch
      %57 = sbr.rel (0) target = $region21
    $region20: #{teacnet_forward.1} parent=1 // pred_region
      %59 = vsyncadd [#allocation9], 0
      %s61 = sshll.u32 %s4, 4
      %s62 = int_to_ptr.hbm [resolvable:$true] %s61
      %s63 = sshll.u32 [#allocation8], 4
      %s64 = int_to_ptr.vmem [resolvable:$true] %s63
      %66 = dma.hbm_to_vmem [thread:$0]  %s62, 128, %s64, [#allocation9]
    $region21: #{teacnet_forward.1} parent=1 // pred_fallthru
      _
    // Predicated region
    $region22: #{teacnet_forward.1} parent=1 // pred_check
      _
    $region23: #{teacnet_forward.1} parent=1 // pred_check_branch
      %68 = sbr.rel (0) target = $region25
    $region24: #{teacnet_forward.1} parent=1 // pred_region
      %70 = dma.done [#allocation3], 128
    $region25: #{teacnet_forward.1} parent=1 // pred_fallthru
      _
    // Predicated region
    $region26: #{teacnet_forward.1} parent=1 // pred_check
      _
    $region27: #{teacnet_forward.1} parent=1 // pred_check_branch
      %72 = sbr.rel (0) target = $region29
    $region28: #{teacnet_forward.1} parent=1 // pred_region
      %74 = dma.done [#allocation6], 512
    $region29: #{teacnet_forward.1} parent=1 // pred_fallthru
      _
    // Predicated region
    $region30: #{teacnet_forward.1} parent=1 // pred_check
      _
    $region31: #{teacnet_forward.1} parent=1 // pred_check_branch
      %76 = sbr.rel (0) target = $region33
    $region32: #{teacnet_forward.1} parent=1 // pred_region
      %78 = dma.done [#allocation6], 8192
    $region33: #{teacnet_forward.1} parent=1 // pred_fallthru
      _
    // Predicated region
    $region34: #{teacnet_forward.1} parent=1 // pred_check
      _
    $region35: #{teacnet_forward.1} parent=1 // pred_check_branch
      %80 = sbr.rel (0) target = $region37
    $region36: #{teacnet_forward.1} parent=1 // pred_region
      %82 = dma.done [#allocation9], 128
    $region37: #{teacnet_forward.1} parent=1 // pred_fallthru
      _
    %v83 = vld [vmem:[#allocation2] sm:$0xff]
    %v84 = vld [vmem:[#allocation5] sm:$0xff]
    %v85 = vld [vmem:[#allocation5 + $0x8] sm:$0xff]
    %v86 = vld [vmem:[#allocation5 + $0x10] sm:$0xff]
    %v87 = vld [vmem:[#allocation5 + $0x18] sm:$0xff]
    %v88 = vld [vmem:[%s2] sm:$0x1]
    %v90 = vperm.slane %v88, 0
    %vm92 = vcmask 261120
    %v94 = vsel %vm92, %v83, 0
    %96 = vmatpush.msra.mxu0 0.0
    %97 = vmatpush.msra.mxu0 0.0
    %98 = vmatpush.msra.mxu0 0.0
    %99 = vmatpush.msra.mxu0 0.0
    %100 = vmatpush.msra.mxu0 0.0
    %101 = vmatpush.msra.mxu0 0.0
    %102 = vmatpush.msra.mxu0 0.0
    %103 = vmatpush.msra.mxu0 0.0
    %104 = vmatpush.msra.mxu0 0.0
    %105 = vmatpush.msra.mxu0 0.0
    %106 = vmatpush.msra.mxu0 0.0
    %107 = vmatpush.msra.mxu0 0.0
    %108 = vmatpush.msra.mxu0 %v87
    %109 = vmatpush.msra.mxu0 %v86
    %110 = vmatpush.msra.mxu0 %v85
    %111 = vmatpush.msra.mxu0 %v84
    %112 = vmatmul.f32.gmra.mxu0 %v94
    %v113 = vpop.f32.mrf.mxu0
    %v114 = vadd.f32 %v90, %v113
    %115 = vdwg.mxu0
    %vm116 = vcmask 523264
    %117 = vst.msk [vmem:[#allocation10] sm:$0xff] %vm116, %v114
    %v118 = vld [vmem:[#allocation7] sm:$0xff]
    %v119 = vld [vmem:[#allocation7 + $0x8] sm:$0xff]
    %v120 = vld [vmem:[#allocation7 + $0x40] sm:$0xff]
    %v121 = vld [vmem:[#allocation7 + $0x48] sm:$0xff]
    %v122 = vld [vmem:[#allocation7 + $0x80] sm:$0xff]
    %v123 = vld [vmem:[#allocation7 + $0x88] sm:$0xff]
    %v124 = vld [vmem:[#allocation7 + $0xc0] sm:$0xff]
    %v125 = vld [vmem:[#allocation7 + $0xc8] sm:$0xff]
    %v126 = vld [vmem:[#allocation7 + $0x100] sm:$0xff]
    %v127 = vld [vmem:[#allocation7 + $0x108] sm:$0xff]
    %v128 = vld [vmem:[#allocation7 + $0x140] sm:$0xff]
    %v129 = vld [vmem:[#allocation7 + $0x148] sm:$0xff]
    %v130 = vld [vmem:[#allocation7 + $0x180] sm:$0xff]
    %v131 = vld [vmem:[#allocation7 + $0x188] sm:$0xff]
    %v132 = vld [vmem:[#allocation7 + $0x1c0] sm:$0xff]
    %v133 = vld [vmem:[#allocation7 + $0x1c8] sm:$0xff]
    %v134 = vld [vmem:[#allocation8] sm:$0x3]
    %v136 = vperm.slane %v134, 0
    %v137 = vperm.slane %v134, 1
    %v141 = vsel %vm116, %v114, 0
    %143 = vmatpush.msra.mxu0 0.0
    %144 = vmatpush.msra.mxu0 0.0
    %145 = vmatpush.msra.mxu0 0.0
    %146 = vmatpush.msra.mxu0 0.0
    %147 = vmatpush.msra.mxu0 0.0
    %148 = vmatpush.msra.mxu0 0.0
    %149 = vmatpush.msra.mxu0 0.0
    %150 = vmatpush.msra.mxu0 0.0
    %151 = vmatpush.msra.mxu0 %v132
    %152 = vmatpush.msra.mxu0 %v130
    %153 = vmatpush.msra.mxu0 %v128
    %154 = vmatpush.msra.mxu0 %v126
    %155 = vmatpush.msra.mxu0 %v124
    %156 = vmatpush.msra.mxu0 %v122
    %157 = vmatpush.msra.mxu0 %v120
    %158 = vmatpush.msra.mxu0 %v118
    %159 = vmatmul.f32.gmra.mxu0 %v141
    %v160 = vpop.f32.mrf.mxu0
    %v161 = vadd.f32 %v136, %v160
    %162 = vdwg.mxu0
    %163 = vmatpush.msra.mxu0 0.0
    %164 = vmatpush.msra.mxu0 0.0
    %165 = vmatpush.msra.mxu0 0.0
    %166 = vmatpush.msra.mxu0 0.0
    %167 = vmatpush.msra.mxu0 0.0
    %168 = vmatpush.msra.mxu0 0.0
    %169 = vmatpush.msra.mxu0 0.0
    %170 = vmatpush.msra.mxu0 0.0
    %171 = vmatpush.msra.mxu0 %v133
    %172 = vmatpush.msra.mxu0 %v131
    %173 = vmatpush.msra.mxu0 %v129
    %174 = vmatpush.msra.mxu0 %v127
    %175 = vmatpush.msra.mxu0 %v125
    %176 = vmatpush.msra.mxu0 %v123
    %177 = vmatpush.msra.mxu0 %v121
    %178 = vmatpush.msra.mxu0 %v119
    %179 = vmatmul.f32.gmra.mxu0 %v141
    %v180 = vpop.f32.mrf.mxu0
    %v181 = vadd.f32 %v137, %v180
    %182 = vdwg.mxu0
    %183 = vst [vmem:[#allocation11] sm:$0xff] %v161
    %184 = vst [vmem:[#allocation11 + $0x8] sm:$0xff] %v181
    %v185 = vld [vmem:[#allocation7 + $0x10] sm:$0xff]
    %v186 = vld [vmem:[#allocation7 + $0x18] sm:$0xff]
    %v187 = vld [vmem:[#allocation7 + $0x50] sm:$0xff]
    %v188 = vld [vmem:[#allocation7 + $0x58] sm:$0xff]
    %v189 = vld [vmem:[#allocation7 + $0x90] sm:$0xff]
    %v190 = vld [vmem:[#allocation7 + $0x98] sm:$0xff]
    %v191 = vld [vmem:[#allocation7 + $0xd0] sm:$0xff]
    %v192 = vld [vmem:[#allocation7 + $0xd8] sm:$0xff]
    %v193 = vld [vmem:[#allocation7 + $0x110] sm:$0xff]
    %v194 = vld [vmem:[#allocation7 + $0x118] sm:$0xff]
    %v195 = vld [vmem:[#allocation7 + $0x150] sm:$0xff]
    %v196 = vld [vmem:[#allocation7 + $0x158] sm:$0xff]
    %v197 = vld [vmem:[#allocation7 + $0x190] sm:$0xff]
    %v198 = vld [vmem:[#allocation7 + $0x198] sm:$0xff]
    %v199 = vld [vmem:[#allocation7 + $0x1d0] sm:$0xff]
    %v200 = vld [vmem:[#allocation7 + $0x1d8] sm:$0xff]
    %v201 = vld [vmem:[#allocation8 + $0x2] sm:$0x3]
    %v203 = vperm.slane %v201, 0
    %v204 = vperm.slane %v201, 1
    %207 = vmatpush.msra.mxu0 0.0
    %208 = vmatpush.msra.mxu0 0.0
    %209 = vmatpush.msra.mxu0 0.0
    %210 = vmatpush.msra.mxu0 0.0
    %211 = vmatpush.msra.mxu0 0.0
    %212 = vmatpush.msra.mxu0 0.0
    %213 = vmatpush.msra.mxu0 0.0
    %214 = vmatpush.msra.mxu0 0.0
    %215 = vmatpush.msra.mxu0 %v199
    %216 = vmatpush.msra.mxu0 %v197
    %217 = vmatpush.msra.mxu0 %v195
    %218 = vmatpush.msra.mxu0 %v193
    %219 = vmatpush.msra.mxu0 %v191
    %220 = vmatpush.msra.mxu0 %v189
    %221 = vmatpush.msra.mxu0 %v187
    %222 = vmatpush.msra.mxu0 %v185
    %223 = vmatmul.f32.gmra.mxu0 %v141
    %v224 = vpop.f32.mrf.mxu0
    %v225 = vadd.f32 %v203, %v224
    %226 = vdwg.mxu0
    %227 = vmatpush.msra.mxu0 0.0
    %228 = vmatpush.msra.mxu0 0.0
    %229 = vmatpush.msra.mxu0 0.0
    %230 = vmatpush.msra.mxu0 0.0
    %231 = vmatpush.msra.mxu0 0.0
    %232 = vmatpush.msra.mxu0 0.0
    %233 = vmatpush.msra.mxu0 0.0
    %234 = vmatpush.msra.mxu0 0.0
    %235 = vmatpush.msra.mxu0 %v200
    %236 = vmatpush.msra.mxu0 %v198
    %237 = vmatpush.msra.mxu0 %v196
    %238 = vmatpush.msra.mxu0 %v194
    %239 = vmatpush.msra.mxu0 %v192
    %240 = vmatpush.msra.mxu0 %v190
    %241 = vmatpush.msra.mxu0 %v188
    %242 = vmatpush.msra.mxu0 %v186
    %243 = vmatmul.f32.gmra.mxu0 %v141
    %v244 = vpop.f32.mrf.mxu0
    %v245 = vadd.f32 %v204, %v244
    %246 = vdwg.mxu0
    %247 = vst [vmem:[#allocation11 + $0x10] sm:$0xff] %v225
    %248 = vst [vmem:[#allocation11 + $0x18] sm:$0xff] %v245
    %v249 = vld [vmem:[#allocation7 + $0x20] sm:$0xff]
    %v250 = vld [vmem:[#allocation7 + $0x28] sm:$0xff]
    %v251 = vld [vmem:[#allocation7 + $0x60] sm:$0xff]
    %v252 = vld [vmem:[#allocation7 + $0x68] sm:$0xff]
    %v253 = vld [vmem:[#allocation7 + $0xa0] sm:$0xff]
    %v254 = vld [vmem:[#allocation7 + $0xa8] sm:$0xff]
    %v255 = vld [vmem:[#allocation7 + $0xe0] sm:$0xff]
    %v256 = vld [vmem:[#allocation7 + $0xe8] sm:$0xff]
    %v257 = vld [vmem:[#allocation7 + $0x120] sm:$0xff]
    %v258 = vld [vmem:[#allocation7 + $0x128] sm:$0xff]
    %v259 = vld [vmem:[#allocation7 + $0x160] sm:$0xff]
    %v260 = vld [vmem:[#allocation7 + $0x168] sm:$0xff]
    %v261 = vld [vmem:[#allocation7 + $0x1a0] sm:$0xff]
    %v262 = vld [vmem:[#allocation7 + $0x1a8] sm:$0xff]
    %v263 = vld [vmem:[#allocation7 + $0x1e0] sm:$0xff]
    %v264 = vld [vmem:[#allocation7 + $0x1e8] sm:$0xff]
    %v265 = vld [vmem:[#allocation8 + $0x4] sm:$0x3]
    %v267 = vperm.slane %v265, 0
    %v268 = vperm.slane %v265, 1
    %271 = vmatpush.msra.mxu0 0.0
    %272 = vmatpush.msra.mxu0 0.0
    %273 = vmatpush.msra.mxu0 0.0
    %274 = vmatpush.msra.mxu0 0.0
    %275 = vmatpush.msra.mxu0 0.0
    %276 = vmatpush.msra.mxu0 0.0
    %277 = vmatpush.msra.mxu0 0.0
    %278 = vmatpush.msra.mxu0 0.0
    %279 = vmatpush.msra.mxu0 %v263
    %280 = vmatpush.msra.mxu0 %v261
    %281 = vmatpush.msra.mxu0 %v259
    %282 = vmatpush.msra.mxu0 %v257
    %283 = vmatpush.msra.mxu0 %v255
    %284 = vmatpush.msra.mxu0 %v253
    %285 = vmatpush.msra.mxu0 %v251
    %286 = vmatpush.msra.mxu0 %v249
    %287 = vmatmul.f32.gmra.mxu0 %v141
    %v288 = vpop.f32.mrf.mxu0
    %v289 = vadd.f32 %v267, %v288
    %290 = vdwg.mxu0
    %291 = vmatpush.msra.mxu0 0.0
    %292 = vmatpush.msra.mxu0 0.0
    %293 = vmatpush.msra.mxu0 0.0
    %294 = vmatpush.msra.mxu0 0.0
    %295 = vmatpush.msra.mxu0 0.0
    %296 = vmatpush.msra.mxu0 0.0
    %297 = vmatpush.msra.mxu0 0.0
    %298 = vmatpush.msra.mxu0 0.0
    %299 = vmatpush.msra.mxu0 %v264
    %300 = vmatpush.msra.mxu0 %v262
    %301 = vmatpush.msra.mxu0 %v260
    %302 = vmatpush.msra.mxu0 %v258
    %303 = vmatpush.msra.mxu0 %v256
    %304 = vmatpush.msra.mxu0 %v254
    %305 = vmatpush.msra.mxu0 %v252
    %306 = vmatpush.msra.mxu0 %v250
    %307 = vmatmul.f32.gmra.mxu0 %v141
    %v308 = vpop.f32.mrf.mxu0
    %v309 = vadd.f32 %v268, %v308
    %310 = vdwg.mxu0
    %311 = vst [vmem:[#allocation11 + $0x20] sm:$0xff] %v289
    %312 = vst [vmem:[#allocation11 + $0x28] sm:$0xff] %v309
    %v313 = vld [vmem:[#allocation7 + $0x30] sm:$0xff]
    %v314 = vld [vmem:[#allocation7 + $0x38] sm:$0xff]
    %v315 = vld [vmem:[#allocation7 + $0x70] sm:$0xff]
    %v316 = vld [vmem:[#allocation7 + $0x78] sm:$0xff]
    %v317 = vld [vmem:[#allocation7 + $0xb0] sm:$0xff]
    %v318 = vld [vmem:[#allocation7 + $0xb8] sm:$0xff]
    %v319 = vld [vmem:[#allocation7 + $0xf0] sm:$0xff]
    %v320 = vld [vmem:[#allocation7 + $0xf8] sm:$0xff]
    %v321 = vld [vmem:[#allocation7 + $0x130] sm:$0xff]
    %v322 = vld [vmem:[#allocation7 + $0x138] sm:$0xff]
    %v323 = vld [vmem:[#allocation7 + $0x170] sm:$0xff]
    %v324 = vld [vmem:[#allocation7 + $0x178] sm:$0xff]
    %v325 = vld [vmem:[#allocation7 + $0x1b0] sm:$0xff]
    %v326 = vld [vmem:[#allocation7 + $0x1b8] sm:$0xff]
    %v327 = vld [vmem:[#allocation7 + $0x1f0] sm:$0xff]
    %v328 = vld [vmem:[#allocation7 + $0x1f8] sm:$0xff]
    %v329 = vld [vmem:[#allocation8 + $0x6] sm:$0x3]
    %v331 = vperm.slane %v329, 0
    %v332 = vperm.slane %v329, 1
    %335 = vmatpush.msra.mxu0 0.0
    %336 = vmatpush.msra.mxu0 0.0
    %337 = vmatpush.msra.mxu0 0.0
    %338 = vmatpush.msra.mxu0 0.0
    %339 = vmatpush.msra.mxu0 0.0
    %340 = vmatpush.msra.mxu0 0.0
    %341 = vmatpush.msra.mxu0 0.0
    %342 = vmatpush.msra.mxu0 0.0
    %343 = vmatpush.msra.mxu0 %v327
    %344 = vmatpush.msra.mxu0 %v325
    %345 = vmatpush.msra.mxu0 %v323
    %346 = vmatpush.msra.mxu0 %v321
    %347 = vmatpush.msra.mxu0 %v319
    %348 = vmatpush.msra.mxu0 %v317
    %349 = vmatpush.msra.mxu0 %v315
    %350 = vmatpush.msra.mxu0 %v313
    %351 = vmatmul.f32.gmra.mxu0 %v141
    %v352 = vpop.f32.mrf.mxu0
    %v353 = vadd.f32 %v331, %v352
    %354 = vdwg.mxu0
    %355 = vmatpush.msra.mxu0 0.0
    %356 = vmatpush.msra.mxu0 0.0
    %357 = vmatpush.msra.mxu0 0.0
    %358 = vmatpush.msra.mxu0 0.0
    %359 = vmatpush.msra.mxu0 0.0
    %360 = vmatpush.msra.mxu0 0.0
    %361 = vmatpush.msra.mxu0 0.0
    %362 = vmatpush.msra.mxu0 0.0
    %363 = vmatpush.msra.mxu0 %v328
    %364 = vmatpush.msra.mxu0 %v326
    %365 = vmatpush.msra.mxu0 %v324
    %366 = vmatpush.msra.mxu0 %v322
    %367 = vmatpush.msra.mxu0 %v320
    %368 = vmatpush.msra.mxu0 %v318
    %369 = vmatpush.msra.mxu0 %v316
    %370 = vmatpush.msra.mxu0 %v314
    %371 = vmatmul.f32.gmra.mxu0 %v141
    %v372 = vpop.f32.mrf.mxu0
    %v373 = vadd.f32 %v332, %v372
    %374 = vdwg.mxu0
    %375 = vst [vmem:[#allocation11 + $0x30] sm:$0xff] %v353
    %vm376 = vcmask 850944
    %377 = vst.msk [vmem:[#allocation11 + $0x38] sm:$0xff] %vm376, %v373
    // Predicated region
    $region38: #{teacnet_forward.1} parent=1 // pred_check
      _
    $region39: #{teacnet_forward.1} parent=1 // pred_check_branch
      %379 = sbr.rel (0) target = $region41
    $region40: #{teacnet_forward.1} parent=1 // pred_region
      %381 = vsyncadd [#allocation4], 0
      %s383 = sshll.u32 [#allocation10], 4
      %s384 = int_to_ptr.vmem [resolvable:$true] %s383
      %s385 = sshll.u32 %s5, 4
      %s386 = int_to_ptr.hbm [resolvable:$true] %s385
      %388 = dma.vmem_to_hbm [thread:$0]  %s384, 128, %s386, [#allocation4]
    $region41: #{teacnet_forward.1} parent=1 // pred_fallthru
      _
    // Predicated region
    $region42: #{teacnet_forward.1} parent=1 // pred_check
      _
    $region43: #{teacnet_forward.1} parent=1 // pred_check_branch
      %390 = sbr.rel (0) target = $region45
    $region44: #{teacnet_forward.1} parent=1 // pred_region
      %392 = vsyncadd [#allocation12], 0
      %s394 = sshll.u32 [#allocation11], 4
      %s395 = int_to_ptr.vmem [resolvable:$true] %s394
      %s396 = sshll.u32 %s6, 4
      %s397 = int_to_ptr.hbm [resolvable:$true] %s396
      %399 = dma.vmem_to_hbm [thread:$0]  %s395, 1024, %s397, [#allocation12]
    $region45: #{teacnet_forward.1} parent=1 // pred_fallthru
      _
    // Predicated region
    $region46: #{teacnet_forward.1} parent=1 // pred_check
      _
    $region47: #{teacnet_forward.1} parent=1 // pred_check_branch
      %401 = sbr.rel (0) target = $region49
    $region48: #{teacnet_forward.1} parent=1 // pred_region
      %403 = dma.done [#allocation4], 128
    $region49: #{teacnet_forward.1} parent=1 // pred_fallthru
      _
    // Predicated region
    $region50: #{teacnet_forward.1} parent=1 // pred_check
      _
    $region51: #{teacnet_forward.1} parent=1 // pred_check_branch
      %405 = sbr.rel (0) target = $region53
    $region52: #{teacnet_forward.1} parent=1 // pred_region
      %407 = dma.done [#allocation12], 1024
    $region53: #{teacnet_forward.1} parent=1 // pred_fallthru
      _
    %408 = vsyncpa [#allocation3], 1
    %409 = vsyncpa [#allocation6], 1
    %410 = vsyncpa [#allocation9], 1
    %411 = vsyncpa [#allocation4], 1
    %412 = vsyncpa [#allocation12], 1

</llo_original>
